<compile_context>
chip_gen: v5e
topology: v5e:2x2
jax: 0.10.0
libtpu: 0.0.40
codegen_flags: <defaults>
</compile_context>

<pallas_src>
import functools

import jax
import jax.numpy as jnp
from jax.experimental import pallas as pl
from jax.experimental.pallas import tpu as pltpu


def _round_up(n: int, m: int) -> int:
    return ((n + m - 1) // m) * m


def _mlp_kernel(x_ref, w1_ref, b1_ref, w2_ref, b2_ref, y_ref, h_ref):
    # Layer 1: bf16 MXU matmul with f32 accumulation; bias + ReLU in f32 (VPU).
    h = jnp.dot(x_ref[...], w1_ref[...], preferred_element_type=jnp.float32)
    h = jnp.maximum(h + b1_ref[...], 0.0)
    h_ref[...] = h.astype(h_ref.dtype)
    # Layer 2: feed the MXU bf16 hidden activations, accumulate in f32.
    y = jnp.dot(h.astype(jnp.bfloat16), w2_ref[...],
                preferred_element_type=jnp.float32)
    y_ref[...] = (y + b2_ref[...]).astype(y_ref.dtype)


def mlp_forward(x, w1, b1, w2, b2):
    """Pallas MLP forward. Returns (y_pred, h_1) matching the PyTorch module.

    x : (B, d_in) float32
    w1: (d_in, hidden), b1: (hidden,) or (1, hidden)
    w2: (hidden, d_out), b2: (d_out,) or (1, d_out)
    """
    B, d_in = x.shape
    hidden = w1.shape[1]
    d_out = w2.shape[1]

    # ---- Padded / tiled geometry -------------------------------------------
    p_din = _round_up(d_in, 128)    # lane-dense K for first matmul
    p_h = _round_up(hidden, 128)    # lane-dense hidden (stores + 2nd K)
    p_dout = _round_up(d_out, 128)  # lane-dense output stores
    # Batch tile: big enough to pipeline/amortize, small enough for tiny B.
    tb = min(512, _round_up(B, 8))
    p_b = _round_up(B, tb)

    # ---- Pad + cast operands at the pallas_call boundary --------------------
    f32 = jnp.float32
    bf16 = jnp.bfloat16
    xp = jnp.zeros((p_b, p_din), bf16).at[:B, :d_in].set(x.astype(bf16))
    w1p = jnp.zeros((p_din, p_h), bf16).at[:d_in, :hidden].set(w1.astype(bf16))
    b1p = jnp.zeros((1, p_h), f32).at[:, :hidden].set(
        b1.reshape(1, hidden).astype(f32))
    w2p = jnp.zeros((p_h, p_dout), bf16).at[:hidden, :d_out].set(w2.astype(bf16))
    b2p = jnp.zeros((1, p_dout), f32).at[:, :d_out].set(
        b2.reshape(1, d_out).astype(f32))

    # ---- VMEM budget (resident weights + double-buffered activation tiles) --
    weight_bytes = (p_din * p_h + p_h * p_dout) * 2 + (p_h + p_dout) * 4
    act_bytes = 2 * tb * (p_din * 2 + p_h * 4 + p_dout * 4)  # 2x: double buffer
    vmem_limit = int(min(max(4 * (weight_bytes + act_bytes), 16 << 20), 48 << 20))

    cost = pl.CostEstimate(
        flops=2 * p_b * (p_din * p_h + p_h * p_dout),
        transcendentals=0,
        bytes_accessed=(xp.size * 2 + w1p.size * 2 + w2p.size * 2
                        + b1p.size * 4 + b2p.size * 4
                        + p_b * p_dout * 4 + p_b * p_h * 4),
    )

    out_shape = (
        jax.ShapeDtypeStruct((p_b, p_dout), f32),  # y_pred (padded)
        jax.ShapeDtypeStruct((p_b, p_h), f32),     # h_1    (padded)
    )
    # TODO(synk): if the caller only needs y_pred, drop the h_1 output to halve
    # HBM writeback bytes at memory-bound sizes.

    grid = (p_b // tb,)
    y_p, h_p = pl.pallas_call(
        _mlp_kernel,
        out_shape=out_shape,
        grid=grid,
        in_specs=[
            pl.BlockSpec((tb, p_din), lambda i: (i, 0)),   # x: tiled over batch
            pl.BlockSpec((p_din, p_h), lambda i: (0, 0)),  # W1: VMEM-resident
            pl.BlockSpec((1, p_h), lambda i: (0, 0)),      # b1: VMEM-resident
            pl.BlockSpec((p_h, p_dout), lambda i: (0, 0)),  # W2: VMEM-resident
            pl.BlockSpec((1, p_dout), lambda i: (0, 0)),    # b2: VMEM-resident
        ],
        out_specs=(
            pl.BlockSpec((tb, p_dout), lambda i: (i, 0)),
            pl.BlockSpec((tb, p_h), lambda i: (i, 0)),
        ),
        compiler_params=pltpu.CompilerParams(
            dimension_semantics=("parallel",),
            vmem_limit_bytes=vmem_limit,
        ),
        cost_estimate=cost,
    )(xp, w1p, b1p, w2p, b2p)

    # Slice padding off before returning.
    return y_p[:B, :d_out], h_p[:B, :hidden]


def init_params(key, input_dim, output_dim, hidden_size=64):
    """Deterministic synthetic init (shapes match nn.Linear's weight.T / bias)."""
    k1, k2, k3, k4 = jax.random.split(key, 4)
    w1 = jax.random.normal(k1, (input_dim, hidden_size), jnp.float32) * 0.1
    b1 = jax.random.normal(k2, (1, hidden_size), jnp.float32) * 0.1
    w2 = jax.random.normal(k3, (hidden_size, output_dim), jnp.float32) * 0.1
    b2 = jax.random.normal(k4, (1, output_dim), jnp.float32) * 0.1
    return w1, b1, w2, b2


if __name__ == "__main__":
    key = jax.random.PRNGKey(0)
    kx, kp = jax.random.split(key)

    batch, input_dim, hidden_size, output_dim = 8, 32, 64, 16
    x = jax.random.normal(kx, (batch, input_dim), jnp.float32)
    w1, b1, w2, b2 = init_params(kp, input_dim, output_dim, hidden_size)

    fwd = jax.jit(mlp_forward)
    y_pred, h_1 = jax.block_until_ready(fwd(x, w1, b1, w2, b2))

    # Pure-JAX f32 reference; bf16 MXU operands => relaxed tolerance.
    h_ref = jnp.maximum(x @ w1 + b1, 0.0)
    y_ref = h_ref @ w2 + b2
    assert y_pred.shape == (batch, output_dim) and h_1.shape == (batch, hidden_size)
    assert jnp.allclose(h_1, h_ref, atol=3e-2, rtol=3e-2), "h_1 mismatch"
    assert jnp.allclose(y_pred, y_ref, atol=3e-2, rtol=3e-2), "y_pred mismatch"

    print("KERNEL_OK")
</pallas_src>

<mosaic_0001>
module attributes {stable_mosaic.version = 11 : i64} {
  func.func @_mlp_kernel(%arg0: i32, %arg1: memref<8x128xbf16, #tpu.memory_space<vmem>>, %arg2: memref<128x128xbf16, #tpu.memory_space<vmem>>, %arg3: memref<1x128xf32, #tpu.memory_space<vmem>>, %arg4: memref<128x128xbf16, #tpu.memory_space<vmem>>, %arg5: memref<1x128xf32, #tpu.memory_space<vmem>>, %arg6: memref<8x128xf32, #tpu.memory_space<vmem>>, %arg7: memref<8x128xf32, #tpu.memory_space<vmem>>) attributes {dimension_semantics = [#tpu.dimension_semantics<parallel>], iteration_bounds = array<i64: 1>, scalar_prefetch = 0 : i64, scratch_operands = 0 : i64, tpu.core_type = #tpu.core_type<tc>, window_params = [{transform_indices = @transform_0, window_bounds = array<i64: 8, 128>}, {pipeline_mode = #tpu.pipeline_mode<synchronous>, transform_indices = @transform_1, window_bounds = array<i64: 128, 128>}, {pipeline_mode = #tpu.pipeline_mode<synchronous>, transform_indices = @transform_2, window_bounds = array<i64: 1, 128>}, {pipeline_mode = #tpu.pipeline_mode<synchronous>, transform_indices = @transform_3, window_bounds = array<i64: 128, 128>}, {pipeline_mode = #tpu.pipeline_mode<synchronous>, transform_indices = @transform_4, window_bounds = array<i64: 1, 128>}, {transform_indices = @transform_5, window_bounds = array<i64: 8, 128>}, {transform_indices = @transform_6, window_bounds = array<i64: 8, 128>}]} {
    %c0 = arith.constant 0 : index
    %c0_0 = arith.constant 0 : index
    %0 = vector.load %arg1[%c0, %c0_0] : memref<8x128xbf16, #tpu.memory_space<vmem>>, vector<8x128xbf16>
    %c0_1 = arith.constant 0 : index
    %c0_2 = arith.constant 0 : index
    %1 = vector.load %arg2[%c0_1, %c0_2] : memref<128x128xbf16, #tpu.memory_space<vmem>>, vector<128x128xbf16>
    %cst = arith.constant dense<0.000000e+00> : vector<8x128xf32>
    %2 = tpu.matmul %0, %1, %cst {dimension_numbers = #tpu.dot_dimension_numbers<[1], [0], [0], [1], [0, 0, 1, 1], [], []>} : vector<8x128xbf16>, vector<128x128xbf16>, vector<8x128xf32> -> vector<8x128xf32>
    %c0_3 = arith.constant 0 : index
    %c0_4 = arith.constant 0 : index
    %3 = vector.load %arg3[%c0_3, %c0_4] : memref<1x128xf32, #tpu.memory_space<vmem>>, vector<1x128xf32>
    %4 = vector.broadcast %3 : vector<1x128xf32> to vector<8x128xf32>
    %5 = arith.addf %2, %4 : vector<8x128xf32>
    %cst_5 = arith.constant 0.000000e+00 : f32
    %6 = vector.broadcast %cst_5 : f32 to vector<8x128xf32>
    %7 = arith.maximumf %5, %6 : vector<8x128xf32>
    %c0_6 = arith.constant 0 : index
    %c0_7 = arith.constant 0 : index
    %8 = vector.load %arg7[%c0_6, %c0_7] : memref<8x128xf32, #tpu.memory_space<vmem>>, vector<8x128xf32>
    tpu.vector_store %arg7[%c0_6, %c0_7], %7 {strides = array<i32>} : memref<8x128xf32, #tpu.memory_space<vmem>>, vector<8x128xf32>,
    %9 = arith.truncf %7 : vector<8x128xf32> to vector<8x128xbf16>
    %c0_8 = arith.constant 0 : index
    %c0_9 = arith.constant 0 : index
    %10 = vector.load %arg4[%c0_8, %c0_9] : memref<128x128xbf16, #tpu.memory_space<vmem>>, vector<128x128xbf16>
    %cst_10 = arith.constant dense<0.000000e+00> : vector<8x128xf32>
    %11 = tpu.matmul %9, %10, %cst_10 {dimension_numbers = #tpu.dot_dimension_numbers<[1], [0], [0], [1], [0, 0, 1, 1], [], []>} : vector<8x128xbf16>, vector<128x128xbf16>, vector<8x128xf32> -> vector<8x128xf32>
    %c0_11 = arith.constant 0 : index
    %c0_12 = arith.constant 0 : index
    %12 = vector.load %arg5[%c0_11, %c0_12] : memref<1x128xf32, #tpu.memory_space<vmem>>, vector<1x128xf32>
    %13 = vector.broadcast %12 : vector<1x128xf32> to vector<8x128xf32>
    %14 = arith.addf %11, %13 : vector<8x128xf32>
    %c0_13 = arith.constant 0 : index
    %c0_14 = arith.constant 0 : index
    %15 = vector.load %arg6[%c0_13, %c0_14] : memref<8x128xf32, #tpu.memory_space<vmem>>, vector<8x128xf32>
    tpu.vector_store %arg6[%c0_13, %c0_14], %14 {strides = array<i32>} : memref<8x128xf32, #tpu.memory_space<vmem>>, vector<8x128xf32>,
    return
  }
  func.func @transform_0(%arg0: i32) -> (i32, i32) {
    %c0_i32 = arith.constant 0 : i32
    %c0_i32_0 = arith.constant 0 : i32
    return %arg0, %c0_i32 : i32, i32
  }
  func.func @transform_1(%arg0: i32) -> (i32, i32) {
    %c0_i32 = arith.constant 0 : i32
    %c0_i32_0 = arith.constant 0 : i32
    %c0_i32_1 = arith.constant 0 : i32
    return %c0_i32, %c0_i32_0 : i32, i32
  }
  func.func @transform_2(%arg0: i32) -> (i32, i32) {
    %c0_i32 = arith.constant 0 : i32
    %c0_i32_0 = arith.constant 0 : i32
    %c0_i32_1 = arith.constant 0 : i32
    return %c0_i32, %c0_i32_0 : i32, i32
  }
  func.func @transform_3(%arg0: i32) -> (i32, i32) {
    %c0_i32 = arith.constant 0 : i32
    %c0_i32_0 = arith.constant 0 : i32
    %c0_i32_1 = arith.constant 0 : i32
    return %c0_i32, %c0_i32_0 : i32, i32
  }
  func.func @transform_4(%arg0: i32) -> (i32, i32) {
    %c0_i32 = arith.constant 0 : i32
    %c0_i32_0 = arith.constant 0 : i32
    %c0_i32_1 = arith.constant 0 : i32
    return %c0_i32, %c0_i32_0 : i32, i32
  }
  func.func @transform_5(%arg0: i32) -> (i32, i32) {
    %c0_i32 = arith.constant 0 : i32
    %c0_i32_0 = arith.constant 0 : i32
    return %arg0, %c0_i32 : i32, i32
  }
  func.func @transform_6(%arg0: i32) -> (i32, i32) {
    %c0_i32 = arith.constant 0 : i32
    %c0_i32_0 = arith.constant 0 : i32
    return %arg0, %c0_i32 : i32, i32
  }
}

</mosaic_0001>

<llo_original>
// kernel: mlp_forward.1
$region0: #{mlp_forward.1}
  #allocation0 [shape = 'u32[]', space=smem, size = 0x4, offset = 0x4, fixed_abs, tag = 'smem constant byte address 0x4 - core index']
  #allocation1 [shape = 'u32[72,128]{1,0:T(1,128)}', space=vmem, size = 0x9000, scoped, tag = 'internal scratch']
  %s0 = inlined_call_operand.vmem [shape: bf16[8,128], index: 0, kind: input, shape index: {}]
  %s1 = inlined_call_operand.vmem [shape: bf16[128,128], index: 1, kind: input, shape index: {}]
  %s2 = inlined_call_operand.vmem [shape: f32[1,128], index: 2, kind: input, shape index: {}]
  %s3 = inlined_call_operand.vmem [shape: bf16[128,128], index: 3, kind: input, shape index: {}]
  %s4 = inlined_call_operand.vmem [shape: f32[1,128], index: 4, kind: input, shape index: {}]
  %s5 = inlined_call_operand.hbm [shape: f32[8,128], index: 5, kind: output, shape index: {0}]
  %s6 = inlined_call_operand.hbm [shape: f32[8,128], index: 6, kind: output, shape index: {1}]
  %7 = xla_tuple %s5, %s6
  %s8 = sld [smem:[#allocation0]]
  $region38: #{mlp_forward.1} parent=0
    _
  %s10 = ssub.s32 1, %s8
  %s11 = scalar_select 0, %s10, %s8
  $region1: #{mlp_forward.1} parent=0
    #allocation2 [shape = 'u8[4096]{0}', space=vmem, size = 0x1000, scoped, tag = 'output window, operand 0, single buffered']
    #allocation3 [shape = 's32[1]{0}', space=sflag, size = 0x4, scoped, tag = 'scoped memory for mlp_forward.1']
    #allocation4 [shape = 'u8[4096]{0}', space=vmem, size = 0x1000, scoped, tag = 'output window, operand 1, single buffered']
    #allocation5 [shape = 's32[1]{0}', space=sflag, size = 0x4, scoped, tag = 'scoped memory for mlp_forward.1']
    %12 = vsyncpa [#allocation3], 0
    %13 = vsyncpa [#allocation5], 0
    // Predicated region
    $region2: #{mlp_forward.1} parent=1 // pred_check
      _
    $region3: #{mlp_forward.1} parent=1 // pred_check_branch
      %15 = sbr.rel (0) target = $region5
    $region4: #{mlp_forward.1} parent=1 // pred_region
      _
    $region5: #{mlp_forward.1} parent=1 // pred_fallthru
      _
    // Predicated region
    $region6: #{mlp_forward.1} parent=1 // pred_check
      _
    $region7: #{mlp_forward.1} parent=1 // pred_check_branch
      %17 = sbr.rel (0) target = $region9
    $region8: #{mlp_forward.1} parent=1 // pred_region
      _
    $region9: #{mlp_forward.1} parent=1 // pred_fallthru
      _
    // Predicated region
    $region10: #{mlp_forward.1} parent=1 // pred_check
      _
    $region11: #{mlp_forward.1} parent=1 // pred_check_branch
      %19 = sbr.rel (0) target = $region13
    $region12: #{mlp_forward.1} parent=1 // pred_region
      _
    $region13: #{mlp_forward.1} parent=1 // pred_fallthru
      _
    // Predicated region
    $region14: #{mlp_forward.1} parent=1 // pred_check
      _
    $region15: #{mlp_forward.1} parent=1 // pred_check_branch
      %21 = sbr.rel (0) target = $region17
    $region16: #{mlp_forward.1} parent=1 // pred_region
      _
    $region17: #{mlp_forward.1} parent=1 // pred_fallthru
      _
    // Predicated region
    $region18: #{mlp_forward.1} parent=1 // pred_check
      _
    $region19: #{mlp_forward.1} parent=1 // pred_check_branch
      %23 = sbr.rel (0) target = $region21
    $region20: #{mlp_forward.1} parent=1 // pred_region
      _
    $region21: #{mlp_forward.1} parent=1 // pred_fallthru
      _
    %v24 = vld [vmem:[%s0] sm:$0xf]
    %v25 = vld [vmem:[%s1] sm:$0xf]
    %v26 = vld [vmem:[%s1 + $0x4] sm:$0xf]
    %v27 = vld [vmem:[%s1 + $0x8] sm:$0xf]
    %v28 = vld [vmem:[%s1 + $0xc] sm:$0xf]
    %v29 = vld [vmem:[%s1 + $0x10] sm:$0xf]
    %v30 = vld [vmem:[%s1 + $0x14] sm:$0xf]
    %v31 = vld [vmem:[%s1 + $0x18] sm:$0xf]
    %v32 = vld [vmem:[%s1 + $0x1c] sm:$0xf]
    %v33 = vld [vmem:[%s1 + $0x20] sm:$0xf]
    %v34 = vld [vmem:[%s1 + $0x24] sm:$0xf]
    %v35 = vld [vmem:[%s1 + $0x28] sm:$0xf]
    %v36 = vld [vmem:[%s1 + $0x2c] sm:$0xf]
    %v37 = vld [vmem:[%s1 + $0x30] sm:$0xf]
    %v38 = vld [vmem:[%s1 + $0x34] sm:$0xf]
    %v39 = vld [vmem:[%s1 + $0x38] sm:$0xf]
    %v40 = vld [vmem:[%s1 + $0x3c] sm:$0xf]
    %v41 = vld [vmem:[%s2] sm:$0x1]
    %v43 = vperm.slane %v41, 0
    %v61 = vunpack.c.l.b16 %v25
    %v62 = vunpack.c.l.b16 %v26
    %v63 = vunpack.c.l.b16 %v27
    %v64 = vunpack.c.l.b16 %v28
    %v65 = vunpack.c.l.b16 %v29
    %v66 = vunpack.c.l.b16 %v30
    %v67 = vunpack.c.l.b16 %v31
    %v68 = vunpack.c.l.b16 %v32
    %v69 = vunpack.c.l.b16 %v33
    %v70 = vunpack.c.l.b16 %v34
    %v71 = vunpack.c.l.b16 %v35
    %v72 = vunpack.c.l.b16 %v36
    %v73 = vunpack.c.l.b16 %v37
    %v74 = vunpack.c.l.b16 %v38
    %v75 = vunpack.c.l.b16 %v39
    %v76 = vunpack.c.l.b16 %v40
    %v77 = vpack.c.b16 %v62, %v61
    %v78 = vpack.c.b16 %v64, %v63
    %v79 = vpack.c.b16 %v66, %v65
    %v80 = vpack.c.b16 %v68, %v67
    %v81 = vpack.c.b16 %v70, %v69
    %v82 = vpack.c.b16 %v72, %v71
    %v83 = vpack.c.b16 %v74, %v73
    %v84 = vpack.c.b16 %v76, %v75
    %93 = vmatpush.bf16.msra.mxu0 %v84
    %94 = vmatpush.bf16.msra.mxu0 %v83
    %95 = vmatpush.bf16.msra.mxu0 %v82
    %96 = vmatpush.bf16.msra.mxu0 %v81
    %97 = vmatpush.bf16.msra.mxu0 %v80
    %98 = vmatpush.bf16.msra.mxu0 %v79
    %99 = vmatpush.bf16.msra.mxu0 %v78
    %100 = vmatpush.bf16.msra.mxu0 %v77
    %101 = vmatmul.bf16.gmra.mxu0 %v24
    %v102 = vpop.f32.mrf.mxu0
    %v103 = vadd.f32 %v43, %v102
    %v104 = vpop.f32.mrf.mxu0
    %105 = vdwg.mxu0
    %v106 = vmax.f32 %v103, 0.0
    %107 = vst [vmem:[#allocation4] sm:$0xff] %v106
    %v108 = vpack.c.bf16 %v106, %v106
    %v109 = vld [vmem:[%s3] sm:$0xf]
    %v110 = vld [vmem:[%s3 + $0x4] sm:$0xf]
    %v111 = vld [vmem:[%s3 + $0x8] sm:$0xf]
    %v112 = vld [vmem:[%s3 + $0xc] sm:$0xf]
    %v113 = vld [vmem:[%s3 + $0x10] sm:$0xf]
    %v114 = vld [vmem:[%s3 + $0x14] sm:$0xf]
    %v115 = vld [vmem:[%s3 + $0x18] sm:$0xf]
    %v116 = vld [vmem:[%s3 + $0x1c] sm:$0xf]
    %v117 = vld [vmem:[%s3 + $0x20] sm:$0xf]
    %v118 = vld [vmem:[%s3 + $0x24] sm:$0xf]
    %v119 = vld [vmem:[%s3 + $0x28] sm:$0xf]
    %v120 = vld [vmem:[%s3 + $0x2c] sm:$0xf]
    %v121 = vld [vmem:[%s3 + $0x30] sm:$0xf]
    %v122 = vld [vmem:[%s3 + $0x34] sm:$0xf]
    %v123 = vld [vmem:[%s3 + $0x38] sm:$0xf]
    %v124 = vld [vmem:[%s3 + $0x3c] sm:$0xf]
    %v125 = vld [vmem:[%s4] sm:$0x1]
    %v127 = vperm.slane %v125, 0
    %v145 = vunpack.c.l.b16 %v109
    %v146 = vunpack.c.l.b16 %v110
    %v147 = vunpack.c.l.b16 %v111
    %v148 = vunpack.c.l.b16 %v112
    %v149 = vunpack.c.l.b16 %v113
    %v150 = vunpack.c.l.b16 %v114
    %v151 = vunpack.c.l.b16 %v115
    %v152 = vunpack.c.l.b16 %v116
    %v153 = vunpack.c.l.b16 %v117
    %v154 = vunpack.c.l.b16 %v118
    %v155 = vunpack.c.l.b16 %v119
    %v156 = vunpack.c.l.b16 %v120
    %v157 = vunpack.c.l.b16 %v121
    %v158 = vunpack.c.l.b16 %v122
    %v159 = vunpack.c.l.b16 %v123
    %v160 = vunpack.c.l.b16 %v124
    %v161 = vpack.c.b16 %v146, %v145
    %v162 = vpack.c.b16 %v148, %v147
    %v163 = vpack.c.b16 %v150, %v149
    %v164 = vpack.c.b16 %v152, %v151
    %v165 = vpack.c.b16 %v154, %v153
    %v166 = vpack.c.b16 %v156, %v155
    %v167 = vpack.c.b16 %v158, %v157
    %v168 = vpack.c.b16 %v160, %v159
    %177 = vmatpush.bf16.msra.mxu0 %v168
    %178 = vmatpush.bf16.msra.mxu0 %v167
    %179 = vmatpush.bf16.msra.mxu0 %v166
    %180 = vmatpush.bf16.msra.mxu0 %v165
    %181 = vmatpush.bf16.msra.mxu0 %v164
    %182 = vmatpush.bf16.msra.mxu0 %v163
    %183 = vmatpush.bf16.msra.mxu0 %v162
    %184 = vmatpush.bf16.msra.mxu0 %v161
    %185 = vmatmul.bf16.gmra.mxu0 %v108
    %v186 = vpop.f32.mrf.mxu0
    %v187 = vadd.f32 %v127, %v186
    %v188 = vpop.f32.mrf.mxu0
    %189 = vdwg.mxu0
    %190 = vst [vmem:[#allocation2] sm:$0xff] %v187
    // Predicated region
    $region22: #{mlp_forward.1} parent=1 // pred_check
      _
    $region23: #{mlp_forward.1} parent=1 // pred_check_branch
      %192 = sbr.rel (0) target = $region25
    $region24: #{mlp_forward.1} parent=1 // pred_region
      %194 = vsyncadd [#allocation3], 0
      %s196 = sshll.u32 [#allocation2], 4
      %s197 = int_to_ptr.vmem [resolvable:$true] %s196
      %s198 = sshll.u32 %s5, 4
      %s199 = int_to_ptr.hbm [resolvable:$true] %s198
      %201 = dma.vmem_to_hbm [thread:$0]  %s197, 128, %s199, [#allocation3]
    $region25: #{mlp_forward.1} parent=1 // pred_fallthru
      _
    // Predicated region
    $region26: #{mlp_forward.1} parent=1 // pred_check
      _
    $region27: #{mlp_forward.1} parent=1 // pred_check_branch
      %203 = sbr.rel (0) target = $region29
    $region28: #{mlp_forward.1} parent=1 // pred_region
      %205 = vsyncadd [#allocation5], 0
      %s207 = sshll.u32 [#allocation4], 4
      %s208 = int_to_ptr.vmem [resolvable:$true] %s207
      %s209 = sshll.u32 %s6, 4
      %s210 = int_to_ptr.hbm [resolvable:$true] %s209
      %212 = dma.vmem_to_hbm [thread:$0]  %s208, 128, %s210, [#allocation5]
    $region29: #{mlp_forward.1} parent=1 // pred_fallthru
      _
    // Predicated region
    $region30: #{mlp_forward.1} parent=1 // pred_check
      _
    $region31: #{mlp_forward.1} parent=1 // pred_check_branch
      %214 = sbr.rel (0) target = $region33
    $region32: #{mlp_forward.1} parent=1 // pred_region
      %216 = dma.done [#allocation3], 128
    $region33: #{mlp_forward.1} parent=1 // pred_fallthru
      _
    // Predicated region
    $region34: #{mlp_forward.1} parent=1 // pred_check
      _
    $region35: #{mlp_forward.1} parent=1 // pred_check_branch
      %218 = sbr.rel (0) target = $region37
    $region36: #{mlp_forward.1} parent=1 // pred_region
      %220 = dma.done [#allocation5], 128
    $region37: #{mlp_forward.1} parent=1 // pred_fallthru
      _
    %221 = vsyncpa [#allocation3], 1
    %222 = vsyncpa [#allocation5], 1

</llo_original>
